<compile_context>
chip_gen: v6e
topology: v6e:2x2x1
jax: 0.10.0
libtpu: 0.0.40
codegen_flags: <defaults>
</compile_context>

<pallas_src>
import functools

import jax
import jax.numpy as jnp
from jax.experimental import pallas as pl
from jax.experimental.pallas import tpu as pltpu


def _sigmoid(z):
    # 1/(1+exp(-z)) via tanh so it lowers onto the EUP (transcendental unit,
    # its own VLIW slot) instead of a VPU divide.
    return 0.5 * jnp.tanh(0.5 * z) + 0.5


# --------------------------------------------------------------------------- #
# Kernel 1: per-sample pos/neg triplet terms (1-D grid over anchor row tiles)
# --------------------------------------------------------------------------- #
def _per_sample_kernel(a_ref, pos_ref, neg_ref, m_ref, loss_ref, *, alpha):
    a = a_ref[...]                                           # (tn, D)
    m = m_ref[...]                                           # (tn, 1)
    pos = pos_ref[...]                                       # (tn, P, D)
    neg = neg_ref[...]                                       # (tn, Q, D)

    # F.pairwise_distance adds eps=1e-6 to the *difference* before the norm.
    # TODO(synk): for large P/Q/D move this onto the MXU with the Gram identity
    # using a' = a + 1e-6 (exact); with P,Q,D small it is off the critical path.
    eps_pd = 1e-6
    diff_p = a[:, None, :] - pos + eps_pd
    d_p = jnp.sqrt(jnp.sum(diff_p * diff_p, axis=-1))        # (tn, P)
    diff_n = a[:, None, :] - neg + eps_pd
    d_n = jnp.sqrt(jnp.sum(diff_n * diff_n, axis=-1))        # (tn, Q)

    term_pos = d_p * _sigmoid(d_p - m)                       # (tn, P)
    z_neg = m - d_n
    term_neg = jnp.maximum(z_neg, 0.0) * _sigmoid(z_neg)     # (tn, Q)

    loss_ref[...] = (alpha * jnp.mean(term_pos, axis=1, keepdims=True)
                     + (1.0 - alpha) * jnp.mean(term_neg, axis=1, keepdims=True))


# --------------------------------------------------------------------------- #
# Kernel 2: anchor-anchor regularizer over upper-triangle blocks only
# --------------------------------------------------------------------------- #
def _anchor_pair_kernel(row_blk_ref, col_blk_ref,            # scalar-prefetch (SMEM)
                        a_i_ref, a_j_ref, sq_i_ref, sq_j_ref,
                        m_i_ref, m_j_ref, out_ref):
    t = pl.program_id(0)
    tn = a_i_ref.shape[0]

    a_i = a_i_ref[...]                                       # (tn, D)  row tile
    a_j = a_j_ref[...]                                       # (tn, D)  col tile

    # ||x - y||^2 = |x|^2 + |y|^2 - 2 x.y on the MXU; squared norms arrive
    # precomputed as (tn,1)/(1,tn) streams -- no per-block recompute.
    # TODO(synk): revisit Precision.HIGHEST (f32 multi-pass emulation) if
    # tolerances allow bf16 inputs; must re-validate (cancellation-sensitive).
    gram = jax.lax.dot_general(
        a_i, a_j, (((1,), (1,)), ((), ())),
        precision=jax.lax.Precision.HIGHEST,
        preferred_element_type=jnp.float32)                  # (tn, tn)
    d2 = jnp.maximum(sq_i_ref[...] + sq_j_ref[...] - 2.0 * gram, 0.0)
    pairwise = jnp.sqrt(d2 + 1e-8)                           # (tn, tn)

    z = (m_i_ref[...] + m_j_ref[...]) - pairwise
    term = jnp.maximum(z, 0.0) * _sigmoid(z)                 # (tn, tn)

    is_diag = row_blk_ref[t] == col_blk_ref[t]

    # Lane-dense (1, tn) partial row-sum per block; strict-upper-triangle mask
    # is only needed on diagonal blocks (off-diagonal upper blocks are all-ones).
    @pl.when(is_diag)
    def _diag():
        row_l = jax.lax.broadcasted_iota(jnp.int32, (tn, tn), 0)
        col_l = jax.lax.broadcasted_iota(jnp.int32, (tn, tn), 1)
        masked = jnp.where(col_l > row_l, term, 0.0)
        out_ref[0] = jnp.sum(masked, axis=0, keepdims=True)

    @pl.when(jnp.logical_not(is_diag))
    def _off_diag():
        out_ref[0] = jnp.sum(term, axis=0, keepdims=True)


# --------------------------------------------------------------------------- #
# Wrapper
# --------------------------------------------------------------------------- #
def improved_triplet_loss(anchor_group, positive_groups, negative_groups,
                          anchor_group_label, margin_bounds, *, alpha, r,
                          block_n=None):
    """Pallas TPU implementation of ImprovedTripletLoss.forward."""
    anchor = anchor_group.astype(jnp.float32)
    pos = positive_groups.astype(jnp.float32)
    neg = negative_groups.astype(jnp.float32)

    n, d = anchor.shape
    p = pos.shape[1]
    q = neg.shape[1]

    # Tiny glue in XLA: per-anchor margin gather and per-anchor squared norms
    # (hoisted once; everything O(N^2) runs inside the kernels).
    margins = margin_bounds.astype(jnp.float32)[anchor_group_label]
    margin_col = margins.reshape(n, 1)
    margin_row = margins.reshape(1, n)
    sq = jnp.sum(anchor * anchor, axis=1)
    sq_col = sq.reshape(n, 1)
    sq_row = sq.reshape(1, n)

    if block_n is None:
        # 256-wide anchor tiles fill v6e/v7x's 256x256 MXU; harmless on v5e.
        if n % 256 == 0:
            block_n = 256
        elif n % 128 == 0:
            block_n = 128
        else:
            block_n = n  # TODO(synk): pad N to a multiple of 128 instead of
            #              falling back to a single full-size tile.
    assert n % block_n == 0 and (block_n == n or block_n % 128 == 0)
    n_blk = n // block_n

    common_params = pltpu.CompilerParams(
        # Every grid step writes its own output slab -> no cross-step state,
        # safe to shard across TensorCores (v7x megacore).
        dimension_semantics=("parallel",),
    )

    # ---- kernel 1: per-sample pos/neg terms --------------------------------
    per_sample = pl.pallas_call(
        functools.partial(_per_sample_kernel, alpha=float(alpha)),
        out_shape=jax.ShapeDtypeStruct((n, 1), jnp.float32),
        grid_spec=pltpu.PrefetchScalarGridSpec(
            num_scalar_prefetch=0,
            grid=(n_blk,),
            in_specs=[
                pl.BlockSpec((block_n, d), lambda i: (i, 0)),        # anchors
                pl.BlockSpec((block_n, p, d), lambda i: (i, 0, 0)),  # positives
                pl.BlockSpec((block_n, q, d), lambda i: (i, 0, 0)),  # negatives
                pl.BlockSpec((block_n, 1), lambda i: (i, 0)),        # margins
            ],
            out_specs=pl.BlockSpec((block_n, 1), lambda i: (i, 0)),
        ),
        compiler_params=common_params,
    )(anchor, pos, neg, margin_col)

    # ---- kernel 2: anchor-anchor regularizer (upper-triangle blocks only) --
    rows, cols = [], []
    for i in range(n_blk):
        for j in range(i, n_blk):
            rows.append(i)
            cols.append(j)
    n_tri = len(rows)                         # n_blk*(n_blk+1)//2
    row_blk = jnp.asarray(rows, dtype=jnp.int32)
    col_blk = jnp.asarray(cols, dtype=jnp.int32)

    # TODO(synk): sweep pipeline_mode=pl.Buffered(3) on the anchor-column stream
    # (the only input whose block changes every step) if the DMA is exposed.
    pair_partials = pl.pallas_call(
        _anchor_pair_kernel,
        out_shape=jax.ShapeDtypeStruct((n_tri, 1, block_n), jnp.float32),
        grid_spec=pltpu.PrefetchScalarGridSpec(
            num_scalar_prefetch=2,            # row_blk, col_blk tables in SMEM
            grid=(n_tri,),
            in_specs=[
                pl.BlockSpec((block_n, d), lambda t, rb, cb: (rb[t], 0)),  # rows
                pl.BlockSpec((block_n, d), lambda t, rb, cb: (cb[t], 0)),  # cols
                pl.BlockSpec((block_n, 1), lambda t, rb, cb: (rb[t], 0)),  # |a_i|^2
                pl.BlockSpec((1, block_n), lambda t, rb, cb: (0, cb[t])),  # |a_j|^2
                pl.BlockSpec((block_n, 1), lambda t, rb, cb: (rb[t], 0)),  # m_i
                pl.BlockSpec((1, block_n), lambda t, rb, cb: (0, cb[t])),  # m_j
            ],
            out_specs=pl.BlockSpec((1, 1, block_n),
                                   lambda t, rb, cb: (t, 0, 0)),
        ),
        compiler_params=common_params,
    )(row_blk, col_blk, anchor, anchor, sq_col, sq_row, margin_col, margin_row)

    # Tiny final reductions in XLA (n + n_tri*block_n scalars).
    n_pairs = n * (n - 1) // 2
    sample_total_loss = jnp.sum(per_sample) / n
    anchor_dist_loss = jnp.sum(pair_partials) / n_pairs
    return r * (anchor_dist_loss / n) + (1.0 - r) * sample_total_loss


# --------------------------------------------------------------------------- #
# Pure-JAX reference (mirrors the PyTorch forward) and self-test
# --------------------------------------------------------------------------- #
def _reference_loss(anchor, pos, neg, labels, margin_bounds, alpha, r):
    n = anchor.shape[0]
    m = margin_bounds[labels]
    d_p = jnp.sqrt(jnp.sum((anchor[:, None, :] - pos + 1e-6) ** 2, axis=-1))
    d_n = jnp.sqrt(jnp.sum((anchor[:, None, :] - neg + 1e-6) ** 2, axis=-1))
    term_pos = d_p / (1 + jnp.exp(-(d_p - m[:, None])))
    term_neg = jnp.clip(m[:, None] - d_n, 0) / (1 + jnp.exp(-(m[:, None] - d_n)))
    loss_i = alpha * term_pos.mean(1) + (1 - alpha) * term_neg.mean(1)
    sample_total_loss = loss_i.sum() / n
    pd = jnp.sqrt(jnp.sum((anchor[:, None, :] - anchor[None, :, :]) ** 2, -1) + 1e-8)
    msum = m[:, None] + m[None, :]
    mask = jnp.triu(jnp.ones_like(pd), k=1)
    z = msum - pd
    term = jnp.clip(z, 0) / (1 + jnp.exp(-z))
    anchor_dist_loss = (term * mask).sum() / mask.sum()
    return r * (anchor_dist_loss / n) + (1 - r) * sample_total_loss


if __name__ == "__main__":
    alpha, r = 0.4, 0.3
    key0, key1 = jax.random.split(jax.random.PRNGKey(0), 2)

    def make_inputs(key, n, p, q, d, c):
        k_a, k_p, k_n, k_l, k_m = jax.random.split(key, 5)
        return (jax.random.normal(k_a, (n, d), dtype=jnp.float32),
                jax.random.normal(k_p, (n, p, d), dtype=jnp.float32),
                jax.random.normal(k_n, (n, q, d), dtype=jnp.float32),
                jax.random.randint(k_l, (n,), 0, c),
                jax.random.uniform(k_m, (c,), dtype=jnp.float32,
                                   minval=0.5, maxval=2.0))

    # Small config (single-tile grids): N=8 anchors, 4 pos, 4 neg, D=32, 3 classes.
    a, pg, ng, lbl, mb = make_inputs(key0, 8, 4, 4, 32, 3)
    loss = improved_triplet_loss(a, pg, ng, lbl, mb, alpha=alpha, r=r)
    loss = jax.block_until_ready(loss)
    ref = _reference_loss(a, pg, ng, lbl, mb, alpha, r)
    assert jnp.allclose(loss, ref, rtol=1e-4, atol=1e-4), (loss, ref)

    # Multi-tile config: 2x2 anchor tiling -> 3 upper-triangle blocks; exercises
    # the scalar-prefetched block tables, diagonal/off-diagonal mask paths and
    # the per-block partial outputs.
    a2, pg2, ng2, lbl2, mb2 = make_inputs(key1, 256, 4, 4, 32, 3)
    loss2 = improved_triplet_loss(a2, pg2, ng2, lbl2, mb2, alpha=alpha, r=r,
                                  block_n=128)
    loss2 = jax.block_until_ready(loss2)
    ref2 = _reference_loss(a2, pg2, ng2, lbl2, mb2, alpha, r)
    assert jnp.allclose(loss2, ref2, rtol=1e-4, atol=1e-4), (loss2, ref2)

    print("KERNEL_OK")
</pallas_src>

<mosaic_0001>
module attributes {stable_mosaic.version = 11 : i64} {
  func.func @_per_sample_kernel(%arg0: i32, %arg1: memref<8x32xf32, #tpu.memory_space<vmem>>, %arg2: memref<8x4x32xf32, #tpu.memory_space<vmem>>, %arg3: memref<8x4x32xf32, #tpu.memory_space<vmem>>, %arg4: memref<8x1xf32, #tpu.memory_space<vmem>>, %arg5: memref<8x1xf32, #tpu.memory_space<vmem>>) attributes {dimension_semantics = [#tpu.dimension_semantics<parallel>], iteration_bounds = array<i64: 1>, scalar_prefetch = 0 : i64, scratch_operands = 0 : i64, tpu.core_type = #tpu.core_type<tc>, window_params = [{transform_indices = @transform_0, window_bounds = array<i64: 8, 32>}, {transform_indices = @transform_1, window_bounds = array<i64: 8, 4, 32>}, {transform_indices = @transform_2, window_bounds = array<i64: 8, 4, 32>}, {transform_indices = @transform_3, window_bounds = array<i64: 8, 1>}, {transform_indices = @transform_4, window_bounds = array<i64: 8, 1>}]} {
    %c0 = arith.constant 0 : index
    %c0_0 = arith.constant 0 : index
    %0 = vector.load %arg1[%c0, %c0_0] : memref<8x32xf32, #tpu.memory_space<vmem>>, vector<8x32xf32>
    %c0_1 = arith.constant 0 : index
    %c0_2 = arith.constant 0 : index
    %1 = vector.load %arg4[%c0_1, %c0_2] : memref<8x1xf32, #tpu.memory_space<vmem>>, vector<8x1xf32>
    %c0_3 = arith.constant 0 : index
    %c0_4 = arith.constant 0 : index
    %c0_5 = arith.constant 0 : index
    %2 = vector.load %arg2[%c0_3, %c0_4, %c0_5] : memref<8x4x32xf32, #tpu.memory_space<vmem>>, vector<8x4x32xf32>
    %c0_6 = arith.constant 0 : index
    %c0_7 = arith.constant 0 : index
    %c0_8 = arith.constant 0 : index
    %3 = vector.load %arg3[%c0_6, %c0_7, %c0_8] : memref<8x4x32xf32, #tpu.memory_space<vmem>>, vector<8x4x32xf32>
    %4 = vector.shape_cast %0 : vector<8x32xf32> to vector<8x1x32xf32>
    %5 = vector.broadcast %4 : vector<8x1x32xf32> to vector<8x4x32xf32>
    %6 = arith.subf %5, %2 : vector<8x4x32xf32>
    %cst = arith.constant 9.99999997E-7 : f32
    %7 = vector.broadcast %cst : f32 to vector<8x4x32xf32>
    %8 = arith.addf %6, %7 : vector<8x4x32xf32>
    %9 = arith.mulf %8, %8 : vector<8x4x32xf32>
    %cst_9 = arith.constant dense<0.000000e+00> : vector<8x4xf32>
    %10 = vector.multi_reduction <add>, %9, %cst_9 [2] : vector<8x4x32xf32> to vector<8x4xf32>
    %11 = math.sqrt %10 : vector<8x4xf32>
    %12 = vector.shape_cast %0 : vector<8x32xf32> to vector<8x1x32xf32>
    %13 = vector.broadcast %12 : vector<8x1x32xf32> to vector<8x4x32xf32>
    %14 = arith.subf %13, %3 : vector<8x4x32xf32>
    %cst_10 = arith.constant 9.99999997E-7 : f32
    %15 = vector.broadcast %cst_10 : f32 to vector<8x4x32xf32>
    %16 = arith.addf %14, %15 : vector<8x4x32xf32>
    %17 = arith.mulf %16, %16 : vector<8x4x32xf32>
    %cst_11 = arith.constant dense<0.000000e+00> : vector<8x4xf32>
    %18 = vector.multi_reduction <add>, %17, %cst_11 [2] : vector<8x4x32xf32> to vector<8x4xf32>
    %19 = math.sqrt %18 : vector<8x4xf32>
    %20 = vector.broadcast %1 : vector<8x1xf32> to vector<8x4xf32>
    %21 = arith.subf %11, %20 : vector<8x4xf32>
    %cst_12 = arith.constant 5.000000e-01 : f32
    %22 = vector.broadcast %cst_12 : f32 to vector<8x4xf32>
    %23 = arith.mulf %22, %21 : vector<8x4xf32>
    %24 = math.tanh %23 : vector<8x4xf32>
    %cst_13 = arith.constant 5.000000e-01 : f32
    %25 = vector.broadcast %cst_13 : f32 to vector<8x4xf32>
    %26 = arith.mulf %25, %24 : vector<8x4xf32>
    %cst_14 = arith.constant 5.000000e-01 : f32
    %27 = vector.broadcast %cst_14 : f32 to vector<8x4xf32>
    %28 = arith.addf %26, %27 : vector<8x4xf32>
    %29 = arith.mulf %11, %28 : vector<8x4xf32>
    %30 = vector.broadcast %1 : vector<8x1xf32> to vector<8x4xf32>
    %31 = arith.subf %30, %19 : vector<8x4xf32>
    %cst_15 = arith.constant 0.000000e+00 : f32
    %32 = vector.broadcast %cst_15 : f32 to vector<8x4xf32>
    %33 = arith.maximumf %31, %32 : vector<8x4xf32>
    %cst_16 = arith.constant 5.000000e-01 : f32
    %34 = vector.broadcast %cst_16 : f32 to vector<8x4xf32>
    %35 = arith.mulf %34, %31 : vector<8x4xf32>
    %36 = math.tanh %35 : vector<8x4xf32>
    %cst_17 = arith.constant 5.000000e-01 : f32
    %37 = vector.broadcast %cst_17 : f32 to vector<8x4xf32>
    %38 = arith.mulf %37, %36 : vector<8x4xf32>
    %cst_18 = arith.constant 5.000000e-01 : f32
    %39 = vector.broadcast %cst_18 : f32 to vector<8x4xf32>
    %40 = arith.addf %38, %39 : vector<8x4xf32>
    %41 = arith.mulf %33, %40 : vector<8x4xf32>
    %cst_19 = arith.constant dense<0.000000e+00> : vector<8xf32>
    %42 = vector.multi_reduction <add>, %29, %cst_19 [1] : vector<8x4xf32> to vector<8xf32>
    %43 = vector.shape_cast %42 : vector<8xf32> to vector<8x1xf32>
    %cst_20 = arith.constant 4.000000e+00 : f32
    %44 = vector.broadcast %cst_20 : f32 to vector<8x1xf32>
    %45 = arith.divf %43, %44 : vector<8x1xf32>
    %cst_21 = arith.constant 4.000000e-01 : f32
    %46 = vector.broadcast %cst_21 : f32 to vector<8x1xf32>
    %47 = arith.mulf %46, %45 : vector<8x1xf32>
    %cst_22 = arith.constant dense<0.000000e+00> : vector<8xf32>
    %48 = vector.multi_reduction <add>, %41, %cst_22 [1] : vector<8x4xf32> to vector<8xf32>
    %49 = vector.shape_cast %48 : vector<8xf32> to vector<8x1xf32>
    %cst_23 = arith.constant 4.000000e+00 : f32
    %50 = vector.broadcast %cst_23 : f32 to vector<8x1xf32>
    %51 = arith.divf %49, %50 : vector<8x1xf32>
    %cst_24 = arith.constant 6.000000e-01 : f32
    %52 = vector.broadcast %cst_24 : f32 to vector<8x1xf32>
    %53 = arith.mulf %52, %51 : vector<8x1xf32>
    %54 = arith.addf %47, %53 : vector<8x1xf32>
    %c0_25 = arith.constant 0 : index
    %c0_26 = arith.constant 0 : index
    %55 = vector.load %arg5[%c0_25, %c0_26] : memref<8x1xf32, #tpu.memory_space<vmem>>, vector<8x1xf32>
    tpu.vector_store %arg5[%c0_25, %c0_26], %54 {strides = array<i32>} : memref<8x1xf32, #tpu.memory_space<vmem>>, vector<8x1xf32>,
    return
  }
  func.func @transform_0(%arg0: i32) -> (i32, i32) {
    %c0_i32 = arith.constant 0 : i32
    %c0_i32_0 = arith.constant 0 : i32
    return %arg0, %c0_i32 : i32, i32
  }
  func.func @transform_1(%arg0: i32) -> (i32, i32, i32) {
    %c0_i32 = arith.constant 0 : i32
    %c0_i32_0 = arith.constant 0 : i32
    %c0_i32_1 = arith.constant 0 : i32
    return %arg0, %c0_i32, %c0_i32_0 : i32, i32, i32
  }
  func.func @transform_2(%arg0: i32) -> (i32, i32, i32) {
    %c0_i32 = arith.constant 0 : i32
    %c0_i32_0 = arith.constant 0 : i32
    %c0_i32_1 = arith.constant 0 : i32
    return %arg0, %c0_i32, %c0_i32_0 : i32, i32, i32
  }
  func.func @transform_3(%arg0: i32) -> (i32, i32) {
    %c0_i32 = arith.constant 0 : i32
    %c0_i32_0 = arith.constant 0 : i32
    return %arg0, %c0_i32 : i32, i32
  }
  func.func @transform_4(%arg0: i32) -> (i32, i32) {
    %c0_i32 = arith.constant 0 : i32
    %c0_i32_0 = arith.constant 0 : i32
    return %arg0, %c0_i32 : i32, i32
  }
}

</mosaic_0001>

<llo_original>
// kernel: tpu_custom_call.1
$region0: #{tpu_custom_call.1}
  #allocation0 [shape = 'u32[]', space=smem, size = 0x4, offset = 0x4, fixed_abs, tag = 'smem constant byte address 0x4 - core index']
  #allocation1 [shape = 'u32[144,128]{1,0:T(1,128)}', space=vmem, size = 0x12000, scoped, tag = 'internal scratch']
  %s0 = inlined_call_operand.vmem [shape: f32[8,32], index: 0, kind: input, shape index: {}]
  %s1 = inlined_call_operand.hbm [shape: f32[8,4,32], index: 1, kind: input, shape index: {}]
  %s2 = inlined_call_operand.hbm [shape: f32[8,4,32], index: 2, kind: input, shape index: {}]
  %s3 = inlined_call_operand.vmem [shape: f32[8,1], index: 3, kind: input, shape index: {}]
  %s4 = inlined_call_operand.vmem [shape: f32[8,1], index: 4, kind: output, shape index: {}]
  %s5 = sld [smem:[#allocation0]]
  $region34: #{tpu_custom_call.1} parent=0
    _
  %s7 = ssub.s32 1, %s5
  %s8 = scalar_select 0, %s7, %s5
  $region1: #{tpu_custom_call.1} parent=0
    #allocation2 [shape = 'u8[16384]{0}', space=vmem, size = 0x4000, scoped, tag = 'input window, operand 1, single buffered']
    #allocation3 [shape = 's32[1]{0}', space=sflag, size = 0x4, scoped, tag = 'scoped memory for tpu_custom_call.1']
    #allocation4 [shape = 'u8[16384]{0}', space=vmem, size = 0x4000, scoped, tag = 'input window, operand 2, single buffered']
    #allocation5 [shape = 's32[1]{0}', space=sflag, size = 0x4, scoped, tag = 'scoped memory for tpu_custom_call.1']
    %9 = vsyncpa [#allocation3], 0
    %10 = vsyncpa [#allocation5], 0
    // Predicated region
    $region2: #{tpu_custom_call.1} parent=1 // pred_check
      _
    $region3: #{tpu_custom_call.1} parent=1 // pred_check_branch
      %12 = sbr.rel (0) target = $region5
    $region4: #{tpu_custom_call.1} parent=1 // pred_region
      _
    $region5: #{tpu_custom_call.1} parent=1 // pred_fallthru
      _
    // Predicated region
    $region6: #{tpu_custom_call.1} parent=1 // pred_check
      _
    $region7: #{tpu_custom_call.1} parent=1 // pred_check_branch
      %14 = sbr.rel (0) target = $region9
    $region8: #{tpu_custom_call.1} parent=1 // pred_region
      %s16 = ssub.s32 512, 512
      %17 = vsyncadd [#allocation3], %s16
      %s18 = sshll.u32 [#allocation2], 4
      %s19 = int_to_ptr.vmem [resolvable:$true] %s18
      %24 = dma.hbm_to_vmem [thread:$0]  %s1, 512, %s19, [#allocation3], 64, 64, 4
    $region9: #{tpu_custom_call.1} parent=1 // pred_fallthru
      _
    // Predicated region
    $region10: #{tpu_custom_call.1} parent=1 // pred_check
      _
    $region11: #{tpu_custom_call.1} parent=1 // pred_check_branch
      %26 = sbr.rel (0) target = $region13
    $region12: #{tpu_custom_call.1} parent=1 // pred_region
      %s28 = ssub.s32 512, 512
      %29 = vsyncadd [#allocation5], %s28
      %s30 = sshll.u32 [#allocation4], 4
      %s31 = int_to_ptr.vmem [resolvable:$true] %s30
      %36 = dma.hbm_to_vmem [thread:$0]  %s2, 512, %s31, [#allocation5], 64, 64, 4
    $region13: #{tpu_custom_call.1} parent=1 // pred_fallthru
      _
    // Predicated region
    $region14: #{tpu_custom_call.1} parent=1 // pred_check
      _
    $region15: #{tpu_custom_call.1} parent=1 // pred_check_branch
      %38 = sbr.rel (0) target = $region17
    $region16: #{tpu_custom_call.1} parent=1 // pred_region
      _
    $region17: #{tpu_custom_call.1} parent=1 // pred_fallthru
      _
    // Predicated region
    $region18: #{tpu_custom_call.1} parent=1 // pred_check
      _
    $region19: #{tpu_custom_call.1} parent=1 // pred_check_branch
      %40 = sbr.rel (0) target = $region21
    $region20: #{tpu_custom_call.1} parent=1 // pred_region
      %41 = dma.done [#allocation3], 512
    $region21: #{tpu_custom_call.1} parent=1 // pred_fallthru
      _
    // Predicated region
    $region22: #{tpu_custom_call.1} parent=1 // pred_check
      _
    $region23: #{tpu_custom_call.1} parent=1 // pred_check_branch
      %43 = sbr.rel (0) target = $region25
    $region24: #{tpu_custom_call.1} parent=1 // pred_region
      %44 = dma.done [#allocation5], 512
    $region25: #{tpu_custom_call.1} parent=1 // pred_fallthru
      _
    %v45 = vld [vmem:[%s0] sm:$0xff]
    %v46 = vld [vmem:[%s3] sm:$0xff]
    %v47 = vld [vmem:[#allocation2] sm:$0xf]
    %v48 = vld [vmem:[#allocation2 + $0x4] sm:$0xf]
    %v49 = vld [vmem:[#allocation2 + $0x8] sm:$0xf]
    %v50 = vld [vmem:[#allocation2 + $0xc] sm:$0xf]
    %v51 = vld [vmem:[#allocation2 + $0x10] sm:$0xf]
    %v52 = vld [vmem:[#allocation2 + $0x14] sm:$0xf]
    %v53 = vld [vmem:[#allocation2 + $0x18] sm:$0xf]
    %v54 = vld [vmem:[#allocation2 + $0x1c] sm:$0xf]
    %v55 = vld [vmem:[#allocation4] sm:$0xf]
    %v56 = vld [vmem:[#allocation4 + $0x4] sm:$0xf]
    %v57 = vld [vmem:[#allocation4 + $0x8] sm:$0xf]
    %v58 = vld [vmem:[#allocation4 + $0xc] sm:$0xf]
    %v59 = vld [vmem:[#allocation4 + $0x10] sm:$0xf]
    %v60 = vld [vmem:[#allocation4 + $0x14] sm:$0xf]
    %v61 = vld [vmem:[#allocation4 + $0x18] sm:$0xf]
    %v62 = vld [vmem:[#allocation4 + $0x1c] sm:$0xf]
    %v64 = vcombine.high %v45, %v45
    %v66 = vunpack.c.l.s4 1966171168
    %v67 = vunpack.c.0.s8 %v66
    %v68 = vlaneseq
    %v69 = vshrl.u32 %v68, 7
    %v70 = vsub.s32 %v67, %v69
    %v71 = vrot.slane %v45, %v70
    %v73 = vunpack.c.l.s4 1966171168
    %v74 = vunpack.c.0.s8 %v73
    %v75 = vlaneseq
    %v76 = vshrl.u32 %v75, 7
    %v77 = vsub.s32 %v74, %v76
    %v78 = vrot.slane %v64, %v77
    %v79 = vcombine.high %v71, %v71
    %v80 = vcombine.high %v78, %v78
    %v82 = vunpack.c.l.s4 1966171168
    %v83 = vunpack.c.0.s8 %v82
    %v84 = vlaneseq
    %v85 = vshrl.u32 %v84, 7
    %v86 = vsub.s32 %v83, %v85
    %v87 = vrot.slane %v71, %v86
    %v89 = vunpack.c.l.s4 1966171168
    %v90 = vunpack.c.0.s8 %v89
    %v91 = vlaneseq
    %v92 = vshrl.u32 %v91, 7
    %v93 = vsub.s32 %v90, %v92
    %v94 = vrot.slane %v78, %v93
    %v96 = vunpack.c.l.s4 1966171168
    %v97 = vunpack.c.0.s8 %v96
    %v98 = vlaneseq
    %v99 = vshrl.u32 %v98, 7
    %v100 = vsub.s32 %v97, %v99
    %v101 = vrot.slane %v79, %v100
    %v103 = vunpack.c.l.s4 1966171168
    %v104 = vunpack.c.0.s8 %v103
    %v105 = vlaneseq
    %v106 = vshrl.u32 %v105, 7
    %v107 = vsub.s32 %v104, %v106
    %v108 = vrot.slane %v80, %v107
    %v109 = vcombine.high %v87, %v87
    %v110 = vcombine.high %v94, %v94
    %v111 = vcombine.high %v101, %v101
    %v112 = vcombine.high %v108, %v108
    %v113 = vlaneseq
    %v114 = vshrl.u32 %v113, 7
    %v115 = vsub.s32 0, %v114
    %v116 = vrot.slane %v87, %v115
    %v117 = vlaneseq
    %v118 = vshrl.u32 %v117, 7
    %v119 = vsub.s32 0, %v118
    %v120 = vrot.slane %v101, %v119
    %v121 = vlaneseq
    %v122 = vshrl.u32 %v121, 7
    %v123 = vsub.s32 0, %v122
    %v124 = vrot.slane %v109, %v123
    %v125 = vlaneseq
    %v126 = vshrl.u32 %v125, 7
    %v127 = vsub.s32 0, %v126
    %v128 = vrot.slane %v111, %v127
    %v129 = vlaneseq
    %v130 = vshrl.u32 %v129, 7
    %v131 = vsub.s32 0, %v130
    %v132 = vrot.slane %v94, %v131
    %v133 = vlaneseq
    %v134 = vshrl.u32 %v133, 7
    %v135 = vsub.s32 0, %v134
    %v136 = vrot.slane %v108, %v135
    %v137 = vlaneseq
    %v138 = vshrl.u32 %v137, 7
    %v139 = vsub.s32 0, %v138
    %v140 = vrot.slane %v110, %v139
    %v141 = vlaneseq
    %v142 = vshrl.u32 %v141, 7
    %v143 = vsub.s32 0, %v142
    %v144 = vrot.slane %v112, %v143
    %v153 = vsub.f32 %v116, %v47
    %v154 = vsub.f32 %v120, %v48
    %v155 = vsub.f32 %v124, %v49
    %v156 = vsub.f32 %v128, %v50
    %v157 = vsub.f32 %v132, %v51
    %v158 = vsub.f32 %v136, %v52
    %v159 = vsub.f32 %v140, %v53
    %v160 = vsub.f32 %v144, %v54
    %v161 = vadd.f32 %v153, 1e-06
    %v162 = vadd.f32 %v154, 1e-06
    %v163 = vadd.f32 %v155, 1e-06
    %v164 = vadd.f32 %v156, 1e-06
    %v165 = vadd.f32 %v157, 1e-06
    %v166 = vadd.f32 %v158, 1e-06
    %v167 = vadd.f32 %v159, 1e-06
    %v168 = vadd.f32 %v160, 1e-06
    %v169 = vmul.f32 %v161, %v161
    %v170 = vmul.f32 %v162, %v162
    %v171 = vmul.f32 %v163, %v163
    %v172 = vmul.f32 %v164, %v164
    %v173 = vmul.f32 %v165, %v165
    %v174 = vmul.f32 %v166, %v166
    %v175 = vmul.f32 %v167, %v167
    %v176 = vmul.f32 %v168, %v168
    %vm177 = vcmask 257024
    %v178 = vsel %vm177, %v169, 0.0
    %179 = vadd.xlane.f32.xlu0 %v178
    %v180 = vpop.xlane.xlu0 %179
    %v181 = vsel %vm177, %v170, 0.0
    %182 = vadd.xlane.f32.xlu0 %v181
    %v183 = vpop.xlane.xlu0 %182
    %v184 = vsel %vm177, %v171, 0.0
    %185 = vadd.xlane.f32.xlu0 %v184
    %v186 = vpop.xlane.xlu0 %185
    %v187 = vsel %vm177, %v172, 0.0
    %188 = vadd.xlane.f32.xlu0 %v187
    %v189 = vpop.xlane.xlu0 %188
    %v190 = vsel %vm177, %v173, 0.0
    %191 = vadd.xlane.f32.xlu0 %v190
    %v192 = vpop.xlane.xlu0 %191
    %v193 = vsel %vm177, %v174, 0.0
    %194 = vadd.xlane.f32.xlu0 %v193
    %v195 = vpop.xlane.xlu0 %194
    %v196 = vsel %vm177, %v175, 0.0
    %197 = vadd.xlane.f32.xlu0 %v196
    %v198 = vpop.xlane.xlu0 %197
    %v199 = vsel %vm177, %v176, 0.0
    %200 = vadd.xlane.f32.xlu0 %v199
    %v201 = vpop.xlane.xlu0 %200
    %v202 = vrsqrt.pop %v180
    %v203 = vmul.f32 %v180, %v202
    %vm204 = vcmp.eq.f32.partialorder %v180, inf
    %v205 = vsel %vm204, %v180, %v203
    %vm206 = vcmp.eq.f32.partialorder %v180, 0.0
    %v207 = vand.u32 %v180, 2147483648
    %v208 = vsel %vm206, %v207, %v205
    %v209 = vrsqrt.pop %v183
    %v210 = vmul.f32 %v183, %v209
    %vm211 = vcmp.eq.f32.partialorder %v183, inf
    %v212 = vsel %vm211, %v183, %v210
    %vm213 = vcmp.eq.f32.partialorder %v183, 0.0
    %v214 = vand.u32 %v183, 2147483648
    %v215 = vsel %vm213, %v214, %v212
    %v216 = vrsqrt.pop %v186
    %v217 = vmul.f32 %v186, %v216
    %vm218 = vcmp.eq.f32.partialorder %v186, inf
    %v219 = vsel %vm218, %v186, %v217
    %vm220 = vcmp.eq.f32.partialorder %v186, 0.0
    %v221 = vand.u32 %v186, 2147483648
    %v222 = vsel %vm220, %v221, %v219
    %v223 = vrsqrt.pop %v189
    %v224 = vmul.f32 %v189, %v223
    %vm225 = vcmp.eq.f32.partialorder %v189, inf
    %v226 = vsel %vm225, %v189, %v224
    %vm227 = vcmp.eq.f32.partialorder %v189, 0.0
    %v228 = vand.u32 %v189, 2147483648
    %v229 = vsel %vm227, %v228, %v226
    %v230 = vrsqrt.pop %v192
    %v231 = vmul.f32 %v192, %v230
    %vm232 = vcmp.eq.f32.partialorder %v192, inf
    %v233 = vsel %vm232, %v192, %v231
    %vm234 = vcmp.eq.f32.partialorder %v192, 0.0
    %v235 = vand.u32 %v192, 2147483648
    %v236 = vsel %vm234, %v235, %v233
    %v237 = vrsqrt.pop %v195
    %v238 = vmul.f32 %v195, %v237
    %vm239 = vcmp.eq.f32.partialorder %v195, inf
    %v240 = vsel %vm239, %v195, %v238
    %vm241 = vcmp.eq.f32.partialorder %v195, 0.0
    %v242 = vand.u32 %v195, 2147483648
    %v243 = vsel %vm241, %v242, %v240
    %v244 = vrsqrt.pop %v198
    %v245 = vmul.f32 %v198, %v244
    %vm246 = vcmp.eq.f32.partialorder %v198, inf
    %v247 = vsel %vm246, %v198, %v245
    %vm248 = vcmp.eq.f32.partialorder %v198, 0.0
    %v249 = vand.u32 %v198, 2147483648
    %v250 = vsel %vm248, %v249, %v247
    %v251 = vrsqrt.pop %v201
    %v252 = vmul.f32 %v201, %v251
    %vm253 = vcmp.eq.f32.partialorder %v201, inf
    %v254 = vsel %vm253, %v201, %v252
    %vm255 = vcmp.eq.f32.partialorder %v201, 0.0
    %v256 = vand.u32 %v201, 2147483648
    %v257 = vsel %vm255, %v256, %v254
    %v258 = vsub.f32 %v116, %v55
    %v259 = vsub.f32 %v120, %v56
    %v260 = vsub.f32 %v124, %v57
    %v261 = vsub.f32 %v128, %v58
    %v262 = vsub.f32 %v132, %v59
    %v263 = vsub.f32 %v136, %v60
    %v264 = vsub.f32 %v140, %v61
    %v265 = vsub.f32 %v144, %v62
    %v266 = vadd.f32 %v258, 1e-06
    %v267 = vadd.f32 %v259, 1e-06
    %v268 = vadd.f32 %v260, 1e-06
    %v269 = vadd.f32 %v261, 1e-06
    %v270 = vadd.f32 %v262, 1e-06
    %v271 = vadd.f32 %v263, 1e-06
    %v272 = vadd.f32 %v264, 1e-06
    %v273 = vadd.f32 %v265, 1e-06
    %v274 = vmul.f32 %v266, %v266
    %v275 = vmul.f32 %v267, %v267
    %v276 = vmul.f32 %v268, %v268
    %v277 = vmul.f32 %v269, %v269
    %v278 = vmul.f32 %v270, %v270
    %v279 = vmul.f32 %v271, %v271
    %v280 = vmul.f32 %v272, %v272
    %v281 = vmul.f32 %v273, %v273
    %v282 = vsel %vm177, %v274, 0.0
    %283 = vadd.xlane.f32.xlu0 %v282
    %v284 = vpop.xlane.xlu0 %283
    %v285 = vsel %vm177, %v275, 0.0
    %286 = vadd.xlane.f32.xlu0 %v285
    %v287 = vpop.xlane.xlu0 %286
    %v288 = vsel %vm177, %v276, 0.0
    %289 = vadd.xlane.f32.xlu0 %v288
    %v290 = vpop.xlane.xlu0 %289
    %v291 = vsel %vm177, %v277, 0.0
    %292 = vadd.xlane.f32.xlu0 %v291
    %v293 = vpop.xlane.xlu0 %292
    %v294 = vsel %vm177, %v278, 0.0
    %295 = vadd.xlane.f32.xlu0 %v294
    %v296 = vpop.xlane.xlu0 %295
    %v297 = vsel %vm177, %v279, 0.0
    %298 = vadd.xlane.f32.xlu0 %v297
    %v299 = vpop.xlane.xlu0 %298
    %v300 = vsel %vm177, %v280, 0.0
    %301 = vadd.xlane.f32.xlu0 %v300
    %v302 = vpop.xlane.xlu0 %301
    %v303 = vsel %vm177, %v281, 0.0
    %304 = vadd.xlane.f32.xlu0 %v303
    %v305 = vpop.xlane.xlu0 %304
    %v306 = vrsqrt.pop %v284
    %v307 = vmul.f32 %v284, %v306
    %vm308 = vcmp.eq.f32.partialorder %v284, inf
    %v309 = vsel %vm308, %v284, %v307
    %vm310 = vcmp.eq.f32.partialorder %v284, 0.0
    %v311 = vand.u32 %v284, 2147483648
    %v312 = vsel %vm310, %v311, %v309
    %v313 = vrsqrt.pop %v287
    %v314 = vmul.f32 %v287, %v313
    %vm315 = vcmp.eq.f32.partialorder %v287, inf
    %v316 = vsel %vm315, %v287, %v314
    %vm317 = vcmp.eq.f32.partialorder %v287, 0.0
    %v318 = vand.u32 %v287, 2147483648
    %v319 = vsel %vm317, %v318, %v316
    %v320 = vrsqrt.pop %v290
    %v321 = vmul.f32 %v290, %v320
    %vm322 = vcmp.eq.f32.partialorder %v290, inf
    %v323 = vsel %vm322, %v290, %v321
    %vm324 = vcmp.eq.f32.partialorder %v290, 0.0
    %v325 = vand.u32 %v290, 2147483648
    %v326 = vsel %vm324, %v325, %v323
    %v327 = vrsqrt.pop %v293
    %v328 = vmul.f32 %v293, %v327
    %vm329 = vcmp.eq.f32.partialorder %v293, inf
    %v330 = vsel %vm329, %v293, %v328
    %vm331 = vcmp.eq.f32.partialorder %v293, 0.0
    %v332 = vand.u32 %v293, 2147483648
    %v333 = vsel %vm331, %v332, %v330
    %v334 = vrsqrt.pop %v296
    %v335 = vmul.f32 %v296, %v334
    %vm336 = vcmp.eq.f32.partialorder %v296, inf
    %v337 = vsel %vm336, %v296, %v335
    %vm338 = vcmp.eq.f32.partialorder %v296, 0.0
    %v339 = vand.u32 %v296, 2147483648
    %v340 = vsel %vm338, %v339, %v337
    %v341 = vrsqrt.pop %v299
    %v342 = vmul.f32 %v299, %v341
    %vm343 = vcmp.eq.f32.partialorder %v299, inf
    %v344 = vsel %vm343, %v299, %v342
    %vm345 = vcmp.eq.f32.partialorder %v299, 0.0
    %v346 = vand.u32 %v299, 2147483648
    %v347 = vsel %vm345, %v346, %v344
    %v348 = vrsqrt.pop %v302
    %v349 = vmul.f32 %v302, %v348
    %vm350 = vcmp.eq.f32.partialorder %v302, inf
    %v351 = vsel %vm350, %v302, %v349
    %vm352 = vcmp.eq.f32.partialorder %v302, 0.0
    %v353 = vand.u32 %v302, 2147483648
    %v354 = vsel %vm352, %v353, %v351
    %v355 = vrsqrt.pop %v305
    %v356 = vmul.f32 %v305, %v355
    %vm357 = vcmp.eq.f32.partialorder %v305, inf
    %v358 = vsel %vm357, %v305, %v356
    %vm359 = vcmp.eq.f32.partialorder %v305, 0.0
    %v360 = vand.u32 %v305, 2147483648
    %v361 = vsel %vm359, %v360, %v358
    %363 = vset.pattern.permute.xlu0 0
    %364 = vperm.xlu0 %363, %v46
    %v365 = vpop.permute.xlu0 %364
    %v367 = vlaneseq
    %v368 = vshrl.u32 %v367, 7
    %v369 = vsub.s32 0, %v368
    %v370 = vrot.slane %v365, %v369
    %v371 = vlaneseq
    %v372 = vshrl.u32 %v371, 7
    %v373 = vsub.s32 1, %v372
    %v374 = vrot.slane %v365, %v373
    %v375 = vlaneseq
    %v376 = vshrl.u32 %v375, 7
    %v377 = vsub.s32 2, %v376
    %v378 = vrot.slane %v365, %v377
    %v379 = vlaneseq
    %v380 = vshrl.u32 %v379, 7
    %v381 = vsub.s32 3, %v380
    %v382 = vrot.slane %v365, %v381
    %v383 = vlaneseq
    %v384 = vshrl.u32 %v383, 7
    %v385 = vsub.s32 4, %v384
    %v386 = vrot.slane %v365, %v385
    %v387 = vlaneseq
    %v388 = vshrl.u32 %v387, 7
    %v389 = vsub.s32 5, %v388
    %v390 = vrot.slane %v365, %v389
    %v391 = vlaneseq
    %v392 = vshrl.u32 %v391, 7
    %v393 = vsub.s32 6, %v392
    %v394 = vrot.slane %v365, %v393
    %v395 = vlaneseq
    %v396 = vshrl.u32 %v395, 7
    %v397 = vsub.s32 7, %v396
    %v398 = vrot.slane %v365, %v397
    %v407 = vsub.f32 %v208, %v370
    %v408 = vsub.f32 %v215, %v374
    %v409 = vsub.f32 %v222, %v378
    %v410 = vsub.f32 %v229, %v382
    %v411 = vsub.f32 %v236, %v386
    %v412 = vsub.f32 %v243, %v390
    %v413 = vsub.f32 %v250, %v394
    %v414 = vsub.f32 %v257, %v398
    %v415 = vmul.f32 %v407, 0.5
    %v416 = vmul.f32 %v408, 0.5
    %v417 = vmul.f32 %v409, 0.5
    %v418 = vmul.f32 %v410, 0.5
    %v419 = vmul.f32 %v411, 0.5
    %v420 = vmul.f32 %v412, 0.5
    %v421 = vmul.f32 %v413, 0.5
    %v422 = vmul.f32 %v414, 0.5
    %v423 = vtanh.pop %v415
    %v424 = vtanh.pop %v416
    %v425 = vtanh.pop %v417
    %v426 = vtanh.pop %v418
    %v427 = vtanh.pop %v419
    %v428 = vtanh.pop %v420
    %v429 = vtanh.pop %v421
    %v430 = vtanh.pop %v422
    %v431 = vmul.f32 %v423, 0.5
    %v432 = vmul.f32 %v424, 0.5
    %v433 = vmul.f32 %v425, 0.5
    %v434 = vmul.f32 %v426, 0.5
    %v435 = vmul.f32 %v427, 0.5
    %v436 = vmul.f32 %v428, 0.5
    %v437 = vmul.f32 %v429, 0.5
    %v438 = vmul.f32 %v430, 0.5
    %v439 = vadd.f32 %v431, 0.5
    %v440 = vadd.f32 %v432, 0.5
    %v441 = vadd.f32 %v433, 0.5
    %v442 = vadd.f32 %v434, 0.5
    %v443 = vadd.f32 %v435, 0.5
    %v444 = vadd.f32 %v436, 0.5
    %v445 = vadd.f32 %v437, 0.5
    %v446 = vadd.f32 %v438, 0.5
    %v447 = vmul.f32 %v208, %v439
    %v448 = vmul.f32 %v215, %v440
    %v449 = vmul.f32 %v222, %v441
    %v450 = vmul.f32 %v229, %v442
    %v451 = vmul.f32 %v236, %v443
    %v452 = vmul.f32 %v243, %v444
    %v453 = vmul.f32 %v250, %v445
    %v454 = vmul.f32 %v257, %v446
    %v463 = vlaneseq
    %v464 = vand.u32 %v463, 127
    %v465 = vlaneseq
    %v466 = vshrl.u32 %v465, 7
    %v467 = vsub.s32 %v464, %v466
    %v468 = vrot.slane %v312, %v467
    %v469 = vlaneseq
    %v470 = vshrl.u32 %v469, 7
    %v471 = vsub.s32 %v464, %v470
    %v472 = vrot.slane %v319, %v471
    %v473 = vlaneseq
    %v474 = vshrl.u32 %v473, 7
    %v475 = vsub.s32 %v464, %v474
    %v476 = vrot.slane %v326, %v475
    %v477 = vlaneseq
    %v478 = vshrl.u32 %v477, 7
    %v479 = vsub.s32 %v464, %v478
    %v480 = vrot.slane %v333, %v479
    %v481 = vlaneseq
    %v482 = vshrl.u32 %v481, 7
    %v483 = vsub.s32 %v464, %v482
    %v484 = vrot.slane %v340, %v483
    %v485 = vlaneseq
    %v486 = vshrl.u32 %v485, 7
    %v487 = vsub.s32 %v464, %v486
    %v488 = vrot.slane %v347, %v487
    %v489 = vlaneseq
    %v490 = vshrl.u32 %v489, 7
    %v491 = vsub.s32 %v464, %v490
    %v492 = vrot.slane %v354, %v491
    %v493 = vlaneseq
    %v494 = vshrl.u32 %v493, 7
    %v495 = vsub.s32 %v464, %v494
    %v496 = vrot.slane %v361, %v495
    %vm497 = vcmask 1041409
    %v498 = vsel %vm497, %v472, %v468
    %vm499 = vcmask 1042434
    %v500 = vsel %vm499, %v476, %v498
    %vm501 = vcmask 1043459
    %v502 = vsel %vm501, %v480, %v500
    %vm503 = vcmask 1044484
    %v504 = vsel %vm503, %v484, %v502
    %vm505 = vcmask 1045509
    %v506 = vsel %vm505, %v488, %v504
    %vm507 = vcmask 1046534
    %v508 = vsel %vm507, %v492, %v506
    %vm509 = vcmask 1047559
    %v510 = vsel %vm509, %v496, %v508
    %v512 = vsub.f32 %v365, %v510
    %v513 = vmax.f32 %v512, 0.0
    %v514 = vmul.f32 %v512, 0.5
    %v515 = vtanh.pop %v514
    %v516 = vmul.f32 %v515, 0.5
    %v517 = vadd.f32 %v516, 0.5
    %v518 = vmul.f32 %v513, %v517
    %527 = vset.pattern.permute.xlu0 0
    %528 = vperm.xlu0 %527, %v447
    %v529 = vpop.permute.xlu0 %528
    %530 = vset.pattern.permute.xlu0 0
    %531 = vperm.xlu0 %530, %v448
    %v532 = vpop.permute.xlu0 %531
    %533 = vset.pattern.permute.xlu0 0
    %534 = vperm.xlu0 %533, %v449
    %v535 = vpop.permute.xlu0 %534
    %536 = vset.pattern.permute.xlu0 0
    %537 = vperm.xlu0 %536, %v450
    %v538 = vpop.permute.xlu0 %537
    %539 = vset.pattern.permute.xlu0 0
    %540 = vperm.xlu0 %539, %v451
    %v541 = vpop.permute.xlu0 %540
    %542 = vset.pattern.permute.xlu0 0
    %543 = vperm.xlu0 %542, %v452
    %v544 = vpop.permute.xlu0 %543
    %545 = vset.pattern.permute.xlu0 0
    %546 = vperm.xlu0 %545, %v453
    %v547 = vpop.permute.xlu0 %546
    %548 = vset.pattern.permute.xlu0 0
    %549 = vperm.xlu0 %548, %v454
    %v550 = vpop.permute.xlu0 %549
    %v551 = vlaneseq
    %v552 = vshrl.u32 %v551, 7
    %v553 = vsub.s32 %v464, %v552
    %v554 = vrot.slane %v529, %v553
    %v555 = vlaneseq
    %v556 = vshrl.u32 %v555, 7
    %v557 = vsub.s32 %v464, %v556
    %v558 = vrot.slane %v532, %v557
    %v559 = vlaneseq
    %v560 = vshrl.u32 %v559, 7
    %v561 = vsub.s32 %v464, %v560
    %v562 = vrot.slane %v535, %v561
    %v563 = vlaneseq
    %v564 = vshrl.u32 %v563, 7
    %v565 = vsub.s32 %v464, %v564
    %v566 = vrot.slane %v538, %v565
    %v567 = vlaneseq
    %v568 = vshrl.u32 %v567, 7
    %v569 = vsub.s32 %v464, %v568
    %v570 = vrot.slane %v541, %v569
    %v571 = vlaneseq
    %v572 = vshrl.u32 %v571, 7
    %v573 = vsub.s32 %v464, %v572
    %v574 = vrot.slane %v544, %v573
    %v575 = vlaneseq
    %v576 = vshrl.u32 %v575, 7
    %v577 = vsub.s32 %v464, %v576
    %v578 = vrot.slane %v547, %v577
    %v579 = vlaneseq
    %v580 = vshrl.u32 %v579, 7
    %v581 = vsub.s32 %v464, %v580
    %v582 = vrot.slane %v550, %v581
    %v583 = vsel %vm497, %v558, %v554
    %v584 = vsel %vm499, %v562, %v583
    %v585 = vsel %vm501, %v566, %v584
    %v586 = vsel %vm503, %v570, %v585
    %v587 = vsel %vm505, %v574, %v586
    %v588 = vsel %vm507, %v578, %v587
    %v589 = vsel %vm509, %v582, %v588
    %vm591 = vcmask 31744
    %v592 = vsel %vm591, %v589, 0.0
    %593 = vadd.xlane.f32.xlu0 %v592
    %v594 = vpop.xlane.xlu0 %593
    %v595 = vrcp.pop 4.0
    %v596 = vmul.f32 %v594, %v595
    %v597 = vmul.f32 %v596, 0.4
    %v598 = vsel %vm591, %v518, 0.0
    %599 = vadd.xlane.f32.xlu0 %v598
    %v600 = vpop.xlane.xlu0 %599
    %v601 = vmul.f32 %v600, %v595
    %v602 = vmul.f32 %v601, 0.6
    %v603 = vadd.f32 %v597, %v602
    %vm604 = vcmask 7168
    %605 = vst.msk [vmem:[%s4] sm:$0xff] %vm604, %v603
    // Predicated region
    $region26: #{tpu_custom_call.1} parent=1 // pred_check
      _
    $region27: #{tpu_custom_call.1} parent=1 // pred_check_branch
      %607 = sbr.rel (0) target = $region29
    $region28: #{tpu_custom_call.1} parent=1 // pred_region
      _
    $region29: #{tpu_custom_call.1} parent=1 // pred_fallthru
      _
    // Predicated region
    $region30: #{tpu_custom_call.1} parent=1 // pred_check
      _
    $region31: #{tpu_custom_call.1} parent=1 // pred_check_branch
      %609 = sbr.rel (0) target = $region33
    $region32: #{tpu_custom_call.1} parent=1 // pred_region
      _
    $region33: #{tpu_custom_call.1} parent=1 // pred_fallthru
      _
    %610 = vsyncpa [#allocation3], 1
    %611 = vsyncpa [#allocation5], 1

</llo_original>
